<compile_context>
chip_gen: v7x
topology: tpu7x:2x2x1
jax: 0.10.0
libtpu: 0.0.40
codegen_flags: <defaults>
</compile_context>

<pallas_src>
import jax
import jax.numpy as jnp
from jax.experimental import pallas as pl
from jax.experimental.pallas import tpu as pltpu

NUM_BOND_TYPE = 6
NUM_BOND_DIRECTION = 3
TM = 128  # destination-node rows per grid step (multiple of 8 and 128)


def _round_up(v, m):
    return ((v + m - 1) // m) * m


def _pad2(a, rows, cols):
    return jnp.pad(a, ((0, rows - a.shape[0]), (0, cols - a.shape[1])))


def _vmem_limit_bytes():
    # ~3/4 of physical VMEM: 48 MiB on v7x (64 MiB), 96 MiB on v5e/v6e (128 MiB).
    try:
        cap = pltpu.get_tpu_info().vmem_capacity_bytes
    except Exception:
        cap = 64 * 1024 * 1024
    return int(cap) * 3 // 4


def gnn_decoder_kernel(p_ref, a_ref, eagg_ref, wenc_ref, w1_ref, b1_ref,
                       w2_ref, b2_ref, out_ref, acc_ref):
    """Grid = (dst-row tiles, src-row tiles).

    acc  = sum_k  A[i-tile, k-tile] @ p[k-tile]            (f32 accumulator)
    aggr = acc @ Wenc + eagg[i-tile]
    out  = relu(aggr @ W1 + b1) @ W2 + b2
    """
    k = pl.program_id(1)

    @pl.when(k == 0)
    def _init():
        acc_ref[...] = jnp.zeros_like(acc_ref)

    # GIN 'add' aggregation of (pre-activated, bf16) source features.
    acc_ref[...] += jnp.dot(a_ref[...], p_ref[...],
                            preferred_element_type=jnp.float32)

    @pl.when(k == pl.num_programs(1) - 1)
    def _finalize():
        # enc_to_dec applied post-aggregation: (A @ p) @ Wenc == A @ (p @ Wenc).
        aggr = jnp.dot(acc_ref[...].astype(jnp.bfloat16), wenc_ref[...],
                       preferred_element_type=jnp.float32) + eagg_ref[...]
        # GIN MLP: Linear(H, 2H) -> ReLU -> Linear(2H, O)
        z = jnp.dot(aggr.astype(jnp.bfloat16), w1_ref[...],
                    preferred_element_type=jnp.float32) + b1_ref[...]
        z = jnp.maximum(z, 0.0)
        out = jnp.dot(z.astype(jnp.bfloat16), w2_ref[...],
                      preferred_element_type=jnp.float32) + b2_ref[...]
        out_ref[...] = out.astype(out_ref.dtype)


@jax.jit
def gnn_decoder_forward(x, edge_index, edge_attr, params):
    N, H = x.shape
    O = params["w2"].shape[1]

    # ---- plain-JAX glue: self loops, embedding lookup, segment sums ----
    src = jnp.concatenate([edge_index[0], jnp.arange(N, dtype=edge_index.dtype)])
    dst = jnp.concatenate([edge_index[1], jnp.arange(N, dtype=edge_index.dtype)])
    self_loop_attr = jnp.zeros((N, 2), dtype=edge_attr.dtype).at[:, 0].set(4)
    ea = jnp.concatenate([edge_attr, self_loop_attr], axis=0)            # [E+N, 2]
    edge_emb = (jnp.take(params["edge_emb1"], ea[:, 0], axis=0)
                + jnp.take(params["edge_emb2"], ea[:, 1], axis=0))       # [E+N, H]

    # Edge-embedding aggregation as a segment-sum (no dense scatter matmul).
    eagg = jnp.zeros((N, H), jnp.float32).at[dst].add(edge_emb)          # [N, H]

    # PReLU hoisted out of the kernel (computed once, not once per grid step),
    # already in bf16 for the MXU.
    alpha = params["prelu_alpha"]
    p = jnp.where(x > 0, x, alpha * x).astype(jnp.bfloat16)              # [N, H]

    # Dense dst x src edge-count matrix (duplicate edges summed correctly).
    # bf16 is exact for counts < 256 (fine for molecular graphs).
    A = jnp.zeros((N, N), jnp.float32).at[dst, src].add(1.0)

    # ---- pad to lane-dense shapes (multiples of 128 in lane-minor dims) ----
    Np = _round_up(max(N, TM), TM)       # multiple of TM (and of 128)
    if Np % 512 == 0:
        TK = 512
    elif Np % 256 == 0:
        TK = 256
    else:
        TK = 128
    Hp = _round_up(H, 128)
    H2p = _round_up(2 * H, 128)          # pad 2H itself, not 2*Hp
    Op = _round_up(O, 128)

    p_p = _pad2(p, Np, Hp)
    A_p = _pad2(A, Np, Np).astype(jnp.bfloat16)
    eagg_p = _pad2(eagg, Np, Hp)
    wenc_p = _pad2(params["w_enc"], Hp, Hp).astype(jnp.bfloat16)
    w1_p = _pad2(params["w1"], Hp, H2p).astype(jnp.bfloat16)
    b1_p = _pad2(params["b1"], 1, H2p)
    w2_p = _pad2(params["w2"], H2p, Op).astype(jnp.bfloat16)
    b2_p = _pad2(params["b2"], 1, Op)

    grid = (Np // TM, Np // TK)

    flops = (2 * Np * Np * Hp           # A @ p
             + 2 * Np * Hp * Hp         # (.) @ Wenc
             + 2 * Np * Hp * H2p        # @ W1
             + 2 * Np * H2p * Op)       # @ W2
    bytes_accessed = (4 * (Np * Hp + Np * Op + H2p + Op)                 # f32
                      + 2 * (Np * Np + Np * Hp + Hp * Hp
                             + Hp * H2p + H2p * Op))                    # bf16

    out_p = pl.pallas_call(
        gnn_decoder_kernel,
        out_shape=jax.ShapeDtypeStruct((Np, Op), jnp.float32),
        grid_spec=pltpu.PrefetchScalarGridSpec(
            num_scalar_prefetch=0,
            grid=grid,
            in_specs=[
                pl.BlockSpec((TK, Hp), lambda i, k: (k, 0)),    # p (src tile)
                pl.BlockSpec((TM, TK), lambda i, k: (i, k)),    # A tile
                pl.BlockSpec((TM, Hp), lambda i, k: (i, 0)),    # eagg tile
                pl.BlockSpec((Hp, Hp), lambda i, k: (0, 0)),    # W_enc
                pl.BlockSpec((Hp, H2p), lambda i, k: (0, 0)),   # W1
                pl.BlockSpec((1, H2p), lambda i, k: (0, 0)),    # b1
                pl.BlockSpec((H2p, Op), lambda i, k: (0, 0)),   # W2
                pl.BlockSpec((1, Op), lambda i, k: (0, 0)),     # b2
            ],
            out_specs=pl.BlockSpec((TM, Op), lambda i, k: (i, 0)),
            scratch_shapes=[pltpu.VMEM((TM, Hp), jnp.float32)],  # A@p accumulator
        ),
        compiler_params=pltpu.CompilerParams(
            dimension_semantics=("parallel", "arbitrary"),
            vmem_limit_bytes=_vmem_limit_bytes(),
        ),
        cost_estimate=pl.CostEstimate(
            flops=flops, transcendentals=0, bytes_accessed=bytes_accessed),
    )(p_p, A_p, eagg_p, wenc_p, w1_p, b1_p, w2_p, b2_p)

    return out_p[:N, :O]


def reference_forward(x, edge_index, edge_attr, params):
    """Pure-JAX (f32) mirror of the PyTorch forward, for verification."""
    N, H = x.shape
    alpha = params["prelu_alpha"]
    h = jnp.where(x > 0, x, alpha * x)
    h = h @ params["w_enc"]
    src = jnp.concatenate([edge_index[0], jnp.arange(N, dtype=edge_index.dtype)])
    dst = jnp.concatenate([edge_index[1], jnp.arange(N, dtype=edge_index.dtype)])
    ea = jnp.concatenate(
        [edge_attr, jnp.zeros((N, 2), edge_attr.dtype).at[:, 0].set(4)], axis=0)
    ee = params["edge_emb1"][ea[:, 0]] + params["edge_emb2"][ea[:, 1]]
    msg = h[src] + ee
    aggr = jnp.zeros((N, H), jnp.float32).at[dst].add(msg)
    z = jnp.maximum(aggr @ params["w1"] + params["b1"], 0.0)
    return z @ params["w2"] + params["b2"]


def init_params(key, hidden_dim, out_dim):
    ks = jax.random.split(key, 6)
    H, O = hidden_dim, out_dim

    def unif(k, shape, fan_in, fan_out):
        lim = (6.0 / (fan_in + fan_out)) ** 0.5
        return jax.random.uniform(k, shape, jnp.float32, -lim, lim)

    params = {
        # dec_token (zeros[1,H]) is unused in forward; omitted.
        "prelu_alpha": jnp.float32(0.25),
        # Stored pre-transposed so the kernel does row-major x @ W.
        "w_enc": unif(ks[0], (H, H), H, H),
        "w1": unif(ks[1], (H, 2 * H), H, 2 * H),
        "b1": jnp.zeros((1, 2 * H), jnp.float32),
        "w2": unif(ks[2], (2 * H, O), 2 * H, O),
        "b2": jnp.zeros((1, O), jnp.float32),
        "edge_emb1": unif(ks[3], (NUM_BOND_TYPE, H), NUM_BOND_TYPE, H),
        "edge_emb2": unif(ks[4], (NUM_BOND_DIRECTION, H), NUM_BOND_DIRECTION, H),
    }
    return params


if __name__ == "__main__":
    key = jax.random.PRNGKey(0)
    k_x, k_src, k_dst, k_t, k_d, k_p = jax.random.split(key, 6)

    N, H, O, E = 16, 32, 32, 24
    x = jax.random.normal(k_x, (N, H), jnp.float32)
    edge_index = jnp.stack([
        jax.random.randint(k_src, (E,), 0, N, jnp.int32),
        jax.random.randint(k_dst, (E,), 0, N, jnp.int32),
    ], axis=0)
    edge_attr = jnp.stack([
        jax.random.randint(k_t, (E,), 0, NUM_BOND_TYPE, jnp.int32),
        jax.random.randint(k_d, (E,), 0, NUM_BOND_DIRECTION, jnp.int32),
    ], axis=1)

    params = init_params(k_p, H, O)

    out = gnn_decoder_forward(x, edge_index, edge_attr, params)
    out = jax.block_until_ready(out)

    ref = reference_forward(x, edge_index, edge_attr, params)
    assert out.shape == (N, O)
    # Tolerance accounts for bf16 MXU operands (f32 accumulation) in the kernel
    # vs. the pure-f32 reference.
    assert jnp.allclose(out, ref, atol=5e-2, rtol=5e-2), "mismatch vs reference"

    print("KERNEL_OK")
</pallas_src>

<mosaic_0001>
module attributes {stable_mosaic.version = 11 : i64} {
  func.func @gnn_decoder_kernel(%arg0: i32, %arg1: i32, %arg2: memref<128x128xbf16, #tpu.memory_space<vmem>>, %arg3: memref<128x128xbf16, #tpu.memory_space<vmem>>, %arg4: memref<128x128xf32, #tpu.memory_space<vmem>>, %arg5: memref<128x128xbf16, #tpu.memory_space<vmem>>, %arg6: memref<128x128xbf16, #tpu.memory_space<vmem>>, %arg7: memref<1x128xf32, #tpu.memory_space<vmem>>, %arg8: memref<128x128xbf16, #tpu.memory_space<vmem>>, %arg9: memref<1x128xf32, #tpu.memory_space<vmem>>, %arg10: memref<128x128xf32, #tpu.memory_space<vmem>>, %arg11: memref<128x128xf32, #tpu.memory_space<vmem>>) attributes {dimension_semantics = [#tpu.dimension_semantics<parallel>, #tpu.dimension_semantics<arbitrary>], iteration_bounds = array<i64: 1, 1>, scalar_prefetch = 0 : i64, scratch_operands = 1 : i64, tpu.core_type = #tpu.core_type<tc>, window_params = [{transform_indices = @transform_0, window_bounds = array<i64: 128, 128>}, {transform_indices = @transform_1, window_bounds = array<i64: 128, 128>}, {transform_indices = @transform_2, window_bounds = array<i64: 128, 128>}, {pipeline_mode = #tpu.pipeline_mode<synchronous>, transform_indices = @transform_3, window_bounds = array<i64: 128, 128>}, {pipeline_mode = #tpu.pipeline_mode<synchronous>, transform_indices = @transform_4, window_bounds = array<i64: 128, 128>}, {pipeline_mode = #tpu.pipeline_mode<synchronous>, transform_indices = @transform_5, window_bounds = array<i64: 1, 128>}, {pipeline_mode = #tpu.pipeline_mode<synchronous>, transform_indices = @transform_6, window_bounds = array<i64: 128, 128>}, {pipeline_mode = #tpu.pipeline_mode<synchronous>, transform_indices = @transform_7, window_bounds = array<i64: 1, 128>}, {transform_indices = @transform_8, window_bounds = array<i64: 128, 128>}]} {
    %c0_i32 = arith.constant 0 : i32
    %0 = arith.cmpi eq, %arg1, %c0_i32 : i32
    %1 = arith.extui %0 : i1 to i32
    %c0_i32_0 = arith.constant 0 : i32
    %2 = arith.cmpi ne, %1, %c0_i32_0 : i32
    scf.if %2 {
      %cst_10 = arith.constant 0.000000e+00 : f32
      %12 = vector.broadcast %cst_10 : f32 to vector<128x128xf32>
      %c0_11 = arith.constant 0 : index
      %c0_12 = arith.constant 0 : index
      %13 = vector.load %arg11[%c0_11, %c0_12] : memref<128x128xf32, #tpu.memory_space<vmem>>, vector<128x128xf32>
      tpu.vector_store %arg11[%c0_11, %c0_12], %12 {strides = array<i32>} : memref<128x128xf32, #tpu.memory_space<vmem>>, vector<128x128xf32>,
    } else {
    }
    %c0 = arith.constant 0 : index
    %c0_1 = arith.constant 0 : index
    %3 = vector.load %arg11[%c0, %c0_1] : memref<128x128xf32, #tpu.memory_space<vmem>>, vector<128x128xf32>
    %c0_2 = arith.constant 0 : index
    %c0_3 = arith.constant 0 : index
    %4 = vector.load %arg3[%c0_2, %c0_3] : memref<128x128xbf16, #tpu.memory_space<vmem>>, vector<128x128xbf16>
    %c0_4 = arith.constant 0 : index
    %c0_5 = arith.constant 0 : index
    %5 = vector.load %arg2[%c0_4, %c0_5] : memref<128x128xbf16, #tpu.memory_space<vmem>>, vector<128x128xbf16>
    %cst = arith.constant dense<0.000000e+00> : vector<128x128xf32>
    %6 = tpu.matmul %4, %5, %cst {dimension_numbers = #tpu.dot_dimension_numbers<[1], [0], [0], [1], [0, 0, 1, 1], [], []>} : vector<128x128xbf16>, vector<128x128xbf16>, vector<128x128xf32> -> vector<128x128xf32>
    %7 = arith.addf %3, %6 : vector<128x128xf32>
    %c0_6 = arith.constant 0 : index
    %c0_7 = arith.constant 0 : index
    %8 = vector.load %arg11[%c0_6, %c0_7] : memref<128x128xf32, #tpu.memory_space<vmem>>, vector<128x128xf32>
    tpu.vector_store %arg11[%c0_6, %c0_7], %7 {strides = array<i32>} : memref<128x128xf32, #tpu.memory_space<vmem>>, vector<128x128xf32>,
    %c0_i32_8 = arith.constant 0 : i32
    %9 = arith.cmpi eq, %arg1, %c0_i32_8 : i32
    %10 = arith.extui %9 : i1 to i32
    %c0_i32_9 = arith.constant 0 : i32
    %11 = arith.cmpi ne, %10, %c0_i32_9 : i32
    scf.if %11 {
      %c0_10 = arith.constant 0 : index
      %c0_11 = arith.constant 0 : index
      %12 = vector.load %arg11[%c0_10, %c0_11] : memref<128x128xf32, #tpu.memory_space<vmem>>, vector<128x128xf32>
      %13 = arith.truncf %12 : vector<128x128xf32> to vector<128x128xbf16>
      %c0_12 = arith.constant 0 : index
      %c0_13 = arith.constant 0 : index
      %14 = vector.load %arg5[%c0_12, %c0_13] : memref<128x128xbf16, #tpu.memory_space<vmem>>, vector<128x128xbf16>
      %cst_14 = arith.constant dense<0.000000e+00> : vector<128x128xf32>
      %15 = tpu.matmul %13, %14, %cst_14 {dimension_numbers = #tpu.dot_dimension_numbers<[1], [0], [0], [1], [0, 0, 1, 1], [], []>} : vector<128x128xbf16>, vector<128x128xbf16>, vector<128x128xf32> -> vector<128x128xf32>
      %c0_15 = arith.constant 0 : index
      %c0_16 = arith.constant 0 : index
      %16 = vector.load %arg4[%c0_15, %c0_16] : memref<128x128xf32, #tpu.memory_space<vmem>>, vector<128x128xf32>
      %17 = arith.addf %15, %16 : vector<128x128xf32>
      %18 = arith.truncf %17 : vector<128x128xf32> to vector<128x128xbf16>
      %c0_17 = arith.constant 0 : index
      %c0_18 = arith.constant 0 : index
      %19 = vector.load %arg6[%c0_17, %c0_18] : memref<128x128xbf16, #tpu.memory_space<vmem>>, vector<128x128xbf16>
      %cst_19 = arith.constant dense<0.000000e+00> : vector<128x128xf32>
      %20 = tpu.matmul %18, %19, %cst_19 {dimension_numbers = #tpu.dot_dimension_numbers<[1], [0], [0], [1], [0, 0, 1, 1], [], []>} : vector<128x128xbf16>, vector<128x128xbf16>, vector<128x128xf32> -> vector<128x128xf32>
      %c0_20 = arith.constant 0 : index
      %c0_21 = arith.constant 0 : index
      %21 = vector.load %arg7[%c0_20, %c0_21] : memref<1x128xf32, #tpu.memory_space<vmem>>, vector<1x128xf32>
      %22 = vector.broadcast %21 : vector<1x128xf32> to vector<128x128xf32>
      %23 = arith.addf %20, %22 : vector<128x128xf32>
      %cst_22 = arith.constant 0.000000e+00 : f32
      %24 = vector.broadcast %cst_22 : f32 to vector<128x128xf32>
      %25 = arith.maximumf %23, %24 : vector<128x128xf32>
      %26 = arith.truncf %25 : vector<128x128xf32> to vector<128x128xbf16>
      %c0_23 = arith.constant 0 : index
      %c0_24 = arith.constant 0 : index
      %27 = vector.load %arg8[%c0_23, %c0_24] : memref<128x128xbf16, #tpu.memory_space<vmem>>, vector<128x128xbf16>
      %cst_25 = arith.constant dense<0.000000e+00> : vector<128x128xf32>
      %28 = tpu.matmul %26, %27, %cst_25 {dimension_numbers = #tpu.dot_dimension_numbers<[1], [0], [0], [1], [0, 0, 1, 1], [], []>} : vector<128x128xbf16>, vector<128x128xbf16>, vector<128x128xf32> -> vector<128x128xf32>
      %c0_26 = arith.constant 0 : index
      %c0_27 = arith.constant 0 : index
      %29 = vector.load %arg9[%c0_26, %c0_27] : memref<1x128xf32, #tpu.memory_space<vmem>>, vector<1x128xf32>
      %30 = vector.broadcast %29 : vector<1x128xf32> to vector<128x128xf32>
      %31 = arith.addf %28, %30 : vector<128x128xf32>
      %c0_28 = arith.constant 0 : index
      %c0_29 = arith.constant 0 : index
      %32 = vector.load %arg10[%c0_28, %c0_29] : memref<128x128xf32, #tpu.memory_space<vmem>>, vector<128x128xf32>
      tpu.vector_store %arg10[%c0_28, %c0_29], %31 {strides = array<i32>} : memref<128x128xf32, #tpu.memory_space<vmem>>, vector<128x128xf32>,
    } else {
    }
    return
  }
  func.func @transform_0(%arg0: i32, %arg1: i32) -> (i32, i32) {
    %c0_i32 = arith.constant 0 : i32
    %c0_i32_0 = arith.constant 0 : i32
    return %arg1, %c0_i32 : i32, i32
  }
  func.func @transform_1(%arg0: i32, %arg1: i32) -> (i32, i32) {
    %c0_i32 = arith.constant 0 : i32
    return %arg0, %arg1 : i32, i32
  }
  func.func @transform_2(%arg0: i32, %arg1: i32) -> (i32, i32) {
    %c0_i32 = arith.constant 0 : i32
    %c0_i32_0 = arith.constant 0 : i32
    return %arg0, %c0_i32 : i32, i32
  }
  func.func @transform_3(%arg0: i32, %arg1: i32) -> (i32, i32) {
    %c0_i32 = arith.constant 0 : i32
    %c0_i32_0 = arith.constant 0 : i32
    %c0_i32_1 = arith.constant 0 : i32
    return %c0_i32, %c0_i32_0 : i32, i32
  }
  func.func @transform_4(%arg0: i32, %arg1: i32) -> (i32, i32) {
    %c0_i32 = arith.constant 0 : i32
    %c0_i32_0 = arith.constant 0 : i32
    %c0_i32_1 = arith.constant 0 : i32
    return %c0_i32, %c0_i32_0 : i32, i32
  }
  func.func @transform_5(%arg0: i32, %arg1: i32) -> (i32, i32) {
    %c0_i32 = arith.constant 0 : i32
    %c0_i32_0 = arith.constant 0 : i32
    %c0_i32_1 = arith.constant 0 : i32
    return %c0_i32, %c0_i32_0 : i32, i32
  }
  func.func @transform_6(%arg0: i32, %arg1: i32) -> (i32, i32) {
    %c0_i32 = arith.constant 0 : i32
    %c0_i32_0 = arith.constant 0 : i32
    %c0_i32_1 = arith.constant 0 : i32
    return %c0_i32, %c0_i32_0 : i32, i32
  }
  func.func @transform_7(%arg0: i32, %arg1: i32) -> (i32, i32) {
    %c0_i32 = arith.constant 0 : i32
    %c0_i32_0 = arith.constant 0 : i32
    %c0_i32_1 = arith.constant 0 : i32
    return %c0_i32, %c0_i32_0 : i32, i32
  }
  func.func @transform_8(%arg0: i32, %arg1: i32) -> (i32, i32) {
    %c0_i32 = arith.constant 0 : i32
    %c0_i32_0 = arith.constant 0 : i32
    return %arg0, %c0_i32 : i32, i32
  }
}

</mosaic_0001>

<llo_original>
// kernel: gnn_decoder_forward.1
$region0: #{gnn_decoder_forward.1}
  #allocation0 [shape = 'u32[]', space=smem, size = 0x4, offset = 0x4, fixed_abs, tag = 'smem constant byte address 0x4 - core index']
  #allocation1 [shape = 'u32[144,128]{1,0:T(1,128)}', space=vmem, size = 0x12000, scoped, tag = 'internal scratch']
  #allocation2 [shape = 'f32[128,128]{1,0:T(8,128)}', space=vmem, size = 0x10000, scoped, tag = 'scratch operand']
  %s0 = inlined_call_operand.vmem [shape: bf16[128,128], index: 0, kind: input, shape index: {}]
  %s1 = inlined_call_operand.vmem [shape: bf16[128,128], index: 1, kind: input, shape index: {}]
  %s2 = inlined_call_operand.vmem [shape: f32[128,128], index: 2, kind: input, shape index: {}]
  %s3 = inlined_call_operand.vmem [shape: bf16[128,128], index: 3, kind: input, shape index: {}]
  %s4 = inlined_call_operand.vmem [shape: bf16[128,128], index: 4, kind: input, shape index: {}]
  %s5 = inlined_call_operand.vmem [shape: f32[1,128], index: 5, kind: input, shape index: {}]
  %s6 = inlined_call_operand.vmem [shape: bf16[128,128], index: 6, kind: input, shape index: {}]
  %s7 = inlined_call_operand.vmem [shape: f32[1,128], index: 7, kind: input, shape index: {}]
  %s8 = inlined_call_operand.vmem [shape: f32[128,128], index: 8, kind: output, shape index: {}]
  %s9 = sld [smem:[#allocation0]]
  $region50: #{gnn_decoder_forward.1} parent=0
    _
  %s11 = ssub.s32 1, %s9
  %s12 = scalar_select 0, %s11, %s9
  // Predicated region
  $region2: #{gnn_decoder_forward.1} parent=0 // pred_check
    _
  $region3: #{gnn_decoder_forward.1} parent=0 // pred_check_branch
    %14 = sbr.rel (0) target = $region5
  $region4: #{gnn_decoder_forward.1} parent=0 // pred_region
    _
  $region5: #{gnn_decoder_forward.1} parent=0 // pred_fallthru
    _
  // Predicated region
  $region6: #{gnn_decoder_forward.1} parent=0 // pred_check
    _
  $region7: #{gnn_decoder_forward.1} parent=0 // pred_check_branch
    %16 = sbr.rel (0) target = $region9
  $region8: #{gnn_decoder_forward.1} parent=0 // pred_region
    _
  $region9: #{gnn_decoder_forward.1} parent=0 // pred_fallthru
    _
  // Predicated region
  $region10: #{gnn_decoder_forward.1} parent=0 // pred_check
    _
  $region11: #{gnn_decoder_forward.1} parent=0 // pred_check_branch
    %18 = sbr.rel (0) target = $region13
  $region12: #{gnn_decoder_forward.1} parent=0 // pred_region
    _
  $region13: #{gnn_decoder_forward.1} parent=0 // pred_fallthru
    _
  // Predicated region
  $region14: #{gnn_decoder_forward.1} parent=0 // pred_check
    _
  $region15: #{gnn_decoder_forward.1} parent=0 // pred_check_branch
    %20 = sbr.rel (0) target = $region17
  $region16: #{gnn_decoder_forward.1} parent=0 // pred_region
    _
  $region17: #{gnn_decoder_forward.1} parent=0 // pred_fallthru
    _
  // Predicated region
  $region18: #{gnn_decoder_forward.1} parent=0 // pred_check
    _
  $region19: #{gnn_decoder_forward.1} parent=0 // pred_check_branch
    %22 = sbr.rel (0) target = $region21
  $region20: #{gnn_decoder_forward.1} parent=0 // pred_region
    _
  $region21: #{gnn_decoder_forward.1} parent=0 // pred_fallthru
    _
  // Predicated region
  $region22: #{gnn_decoder_forward.1} parent=0 // pred_check
    _
  $region23: #{gnn_decoder_forward.1} parent=0 // pred_check_branch
    %24 = sbr.rel (0) target = $region25
  $region24: #{gnn_decoder_forward.1} parent=0 // pred_region
    _
  $region25: #{gnn_decoder_forward.1} parent=0 // pred_fallthru
    _
  // Predicated region
  $region26: #{gnn_decoder_forward.1} parent=0 // pred_check
    _
  $region27: #{gnn_decoder_forward.1} parent=0 // pred_check_branch
    %26 = sbr.rel (0) target = $region29
  $region28: #{gnn_decoder_forward.1} parent=0 // pred_region
    _
  $region29: #{gnn_decoder_forward.1} parent=0 // pred_fallthru
    _
  // Predicated region
  $region30: #{gnn_decoder_forward.1} parent=0 // pred_check
    _
  $region31: #{gnn_decoder_forward.1} parent=0 // pred_check_branch
    %28 = sbr.rel (0) target = $region33
  $region32: #{gnn_decoder_forward.1} parent=0 // pred_region
    _
  $region33: #{gnn_decoder_forward.1} parent=0 // pred_fallthru
    _
  %p30 = scmp.eq.s32.totalorder 0, 0
  // Predicated region
  $region34: #{gnn_decoder_forward.1} parent=0 // pred_check
    %p31 = pneg %p30
  $region35: #{gnn_decoder_forward.1} parent=0 // pred_check_branch
    %33 = sbr.rel (%p31) target = $region37
  $region36: #{gnn_decoder_forward.1} parent=0 // pred_region
    %34 = vst [vmem:[#allocation2] sm:$0xff] 0.0
    %35 = vst [vmem:[#allocation2 + $0x8] sm:$0xff] 0.0
    %36 = vst [vmem:[#allocation2 + $0x10] sm:$0xff] 0.0
    %37 = vst [vmem:[#allocation2 + $0x18] sm:$0xff] 0.0
    %38 = vst [vmem:[#allocation2 + $0x20] sm:$0xff] 0.0
    %39 = vst [vmem:[#allocation2 + $0x28] sm:$0xff] 0.0
    %40 = vst [vmem:[#allocation2 + $0x30] sm:$0xff] 0.0
    %41 = vst [vmem:[#allocation2 + $0x38] sm:$0xff] 0.0
    %42 = vst [vmem:[#allocation2 + $0x40] sm:$0xff] 0.0
    %43 = vst [vmem:[#allocation2 + $0x48] sm:$0xff] 0.0
    %44 = vst [vmem:[#allocation2 + $0x50] sm:$0xff] 0.0
    %45 = vst [vmem:[#allocation2 + $0x58] sm:$0xff] 0.0
    %46 = vst [vmem:[#allocation2 + $0x60] sm:$0xff] 0.0
    %47 = vst [vmem:[#allocation2 + $0x68] sm:$0xff] 0.0
    %48 = vst [vmem:[#allocation2 + $0x70] sm:$0xff] 0.0
    %49 = vst [vmem:[#allocation2 + $0x78] sm:$0xff] 0.0
  $region37: #{gnn_decoder_forward.1} parent=0 // pred_fallthru
    _
  %v50 = vld [vmem:[#allocation2] sm:$0xff]
  %v51 = vld [vmem:[#allocation2 + $0x8] sm:$0xff]
  %v52 = vld [vmem:[#allocation2 + $0x10] sm:$0xff]
  %v53 = vld [vmem:[#allocation2 + $0x18] sm:$0xff]
  %v54 = vld [vmem:[#allocation2 + $0x20] sm:$0xff]
  %v55 = vld [vmem:[#allocation2 + $0x28] sm:$0xff]
  %v56 = vld [vmem:[#allocation2 + $0x30] sm:$0xff]
  %v57 = vld [vmem:[#allocation2 + $0x38] sm:$0xff]
  %v58 = vld [vmem:[#allocation2 + $0x40] sm:$0xff]
  %v59 = vld [vmem:[#allocation2 + $0x48] sm:$0xff]
  %v60 = vld [vmem:[#allocation2 + $0x50] sm:$0xff]
  %v61 = vld [vmem:[#allocation2 + $0x58] sm:$0xff]
  %v62 = vld [vmem:[#allocation2 + $0x60] sm:$0xff]
  %v63 = vld [vmem:[#allocation2 + $0x68] sm:$0xff]
  %v64 = vld [vmem:[#allocation2 + $0x70] sm:$0xff]
  %v65 = vld [vmem:[#allocation2 + $0x78] sm:$0xff]
  %v66 = vld [vmem:[%s1] sm:$0xf]
  %v67 = vld [vmem:[%s1 + $0x4] sm:$0xf]
  %v68 = vld [vmem:[%s1 + $0x8] sm:$0xf]
  %v69 = vld [vmem:[%s1 + $0xc] sm:$0xf]
  %v70 = vld [vmem:[%s1 + $0x10] sm:$0xf]
  %v71 = vld [vmem:[%s1 + $0x14] sm:$0xf]
  %v72 = vld [vmem:[%s1 + $0x18] sm:$0xf]
  %v73 = vld [vmem:[%s1 + $0x1c] sm:$0xf]
  %v74 = vld [vmem:[%s1 + $0x20] sm:$0xf]
  %v75 = vld [vmem:[%s1 + $0x24] sm:$0xf]
  %v76 = vld [vmem:[%s1 + $0x28] sm:$0xf]
  %v77 = vld [vmem:[%s1 + $0x2c] sm:$0xf]
  %v78 = vld [vmem:[%s1 + $0x30] sm:$0xf]
  %v79 = vld [vmem:[%s1 + $0x34] sm:$0xf]
  %v80 = vld [vmem:[%s1 + $0x38] sm:$0xf]
  %v81 = vld [vmem:[%s1 + $0x3c] sm:$0xf]
  %v82 = vld [vmem:[%s0] sm:$0xf]
  %v83 = vld [vmem:[%s0 + $0x4] sm:$0xf]
  %v84 = vld [vmem:[%s0 + $0x8] sm:$0xf]
  %v85 = vld [vmem:[%s0 + $0xc] sm:$0xf]
  %v86 = vld [vmem:[%s0 + $0x10] sm:$0xf]
  %v87 = vld [vmem:[%s0 + $0x14] sm:$0xf]
  %v88 = vld [vmem:[%s0 + $0x18] sm:$0xf]
  %v89 = vld [vmem:[%s0 + $0x1c] sm:$0xf]
  %v90 = vld [vmem:[%s0 + $0x20] sm:$0xf]
  %v91 = vld [vmem:[%s0 + $0x24] sm:$0xf]
  %v92 = vld [vmem:[%s0 + $0x28] sm:$0xf]
  %v93 = vld [vmem:[%s0 + $0x2c] sm:$0xf]
  %v94 = vld [vmem:[%s0 + $0x30] sm:$0xf]
  %v95 = vld [vmem:[%s0 + $0x34] sm:$0xf]
  %v96 = vld [vmem:[%s0 + $0x38] sm:$0xf]
  %v97 = vld [vmem:[%s0 + $0x3c] sm:$0xf]
  %v114 = vunpack.c.l.b16 %v66
  %v115 = vunpack.c.l.b16 %v67
  %v116 = vunpack.c.l.b16 %v68
  %v117 = vunpack.c.l.b16 %v69
  %v118 = vunpack.c.l.b16 %v70
  %v119 = vunpack.c.l.b16 %v71
  %v120 = vunpack.c.l.b16 %v72
  %v121 = vunpack.c.l.b16 %v73
  %v122 = vunpack.c.l.b16 %v74
  %v123 = vunpack.c.l.b16 %v75
  %v124 = vunpack.c.l.b16 %v76
  %v125 = vunpack.c.l.b16 %v77
  %v126 = vunpack.c.l.b16 %v78
  %v127 = vunpack.c.l.b16 %v79
  %v128 = vunpack.c.l.b16 %v80
  %v129 = vunpack.c.l.b16 %v81
  %v130 = vpack.c.b16 %v115, %v114
  %v131 = vpack.c.b16 %v117, %v116
  %v132 = vpack.c.b16 %v119, %v118
  %v133 = vpack.c.b16 %v121, %v120
  %v134 = vpack.c.b16 %v123, %v122
  %v135 = vpack.c.b16 %v125, %v124
  %v136 = vpack.c.b16 %v127, %v126
  %v137 = vpack.c.b16 %v129, %v128
  %v162 = vunpack.c.l.b16 %v82
  %v163 = vunpack.c.l.b16 %v83
  %v164 = vunpack.c.l.b16 %v84
  %v165 = vunpack.c.l.b16 %v85
  %v166 = vunpack.c.l.b16 %v86
  %v167 = vunpack.c.l.b16 %v87
  %v168 = vunpack.c.l.b16 %v88
  %v169 = vunpack.c.l.b16 %v89
  %v170 = vunpack.c.l.b16 %v90
  %v171 = vunpack.c.l.b16 %v91
  %v172 = vunpack.c.l.b16 %v92
  %v173 = vunpack.c.l.b16 %v93
  %v174 = vunpack.c.l.b16 %v94
  %v175 = vunpack.c.l.b16 %v95
  %v176 = vunpack.c.l.b16 %v96
  %v177 = vunpack.c.l.b16 %v97
  %v178 = vpack.c.b16 %v163, %v162
  %v179 = vpack.c.b16 %v165, %v164
  %v180 = vpack.c.b16 %v167, %v166
  %v181 = vpack.c.b16 %v169, %v168
  %v182 = vpack.c.b16 %v171, %v170
  %v183 = vpack.c.b16 %v173, %v172
  %v184 = vpack.c.b16 %v175, %v174
  %v185 = vpack.c.b16 %v177, %v176
  %194 = vmatprep.subr.bf16.mxu0 0
  %195 = vmatpush1.bf16.msra.mxu0 %v178
  %196 = vmatprep.subr.bf16.mxu0 0
  %197 = vmatpush1.bf16.msra.mxu0 %v179
  %198 = vmatprep.subr.bf16.mxu0 0
  %199 = vmatpush1.bf16.msra.mxu0 %v180
  %200 = vmatprep.subr.bf16.mxu0 0
  %201 = vmatpush1.bf16.msra.mxu0 %v181
  %202 = vmatprep.subr.bf16.mxu0 0
  %203 = vmatpush1.bf16.msra.mxu0 %v182
  %204 = vmatprep.subr.bf16.mxu0 0
  %205 = vmatpush1.bf16.msra.mxu0 %v183
  %206 = vmatprep.subr.bf16.mxu0 0
  %207 = vmatpush1.bf16.msra.mxu0 %v184
  %208 = vmatprep.subr.bf16.mxu0 0
  %209 = vmatpush1.bf16.msra.mxu0 %v185
  %210 = vmatprep.subr.bf16.mxu0 0
  %211 = vmatpush1.bf16.msra.mxu0 0
  %212 = vmatprep.subr.bf16.mxu0 0
  %213 = vmatpush1.bf16.msra.mxu0 0
  %214 = vmatprep.subr.bf16.mxu0 0
  %215 = vmatpush1.bf16.msra.mxu0 0
  %216 = vmatprep.subr.bf16.mxu0 0
  %217 = vmatpush1.bf16.msra.mxu0 0
  %218 = vmatprep.subr.bf16.mxu0 0
  %219 = vmatpush1.bf16.msra.mxu0 0
  %220 = vmatprep.subr.bf16.mxu0 0
  %221 = vmatpush1.bf16.msra.mxu0 0
  %222 = vmatprep.subr.bf16.mxu0 0
  %223 = vmatpush1.bf16.msra.mxu0 0
  %224 = vmatprep.subr.bf16.mxu0 0
  %225 = vmatpush1.bf16.msra.mxu0 0
  %226 = vmatprep.mubr.bf16.mxu0 0
  %227 = vmatmul.mubr.bf16.gmra.mrb[0].mxu0 %v130
  %v228 = vpop.f32.mrb[0].mxu0
  %v229 = vadd.f32 0.0, %v228
  %v230 = vpop.f32.mrb[0].mxu0
  %v231 = vpop.f32.mrb[0].mxu0
  %v232 = vadd.f32 0.0, %v231
  %v233 = vpop.f32.mrb[0].mxu0
  %234 = vmatprep.mubr.bf16.mxu0 0
  %235 = vmatmul.mubr.bf16.gmra.mrb[0].mxu0 %v131
  %v236 = vpop.f32.mrb[0].mxu0
  %v237 = vadd.f32 0.0, %v236
  %v238 = vpop.f32.mrb[0].mxu0
  %v239 = vpop.f32.mrb[0].mxu0
  %v240 = vadd.f32 0.0, %v239
  %v241 = vpop.f32.mrb[0].mxu0
  %242 = vmatprep.mubr.bf16.mxu0 0
  %243 = vmatmul.mubr.bf16.gmra.mrb[0].mxu0 %v132
  %v244 = vpop.f32.mrb[0].mxu0
  %v245 = vadd.f32 0.0, %v244
  %v246 = vpop.f32.mrb[0].mxu0
  %v247 = vpop.f32.mrb[0].mxu0
  %v248 = vadd.f32 0.0, %v247
  %v249 = vpop.f32.mrb[0].mxu0
  %250 = vmatprep.mubr.bf16.mxu0 0
  %251 = vmatmul.mubr.bf16.gmra.mrb[0].mxu0 %v133
  %v252 = vpop.f32.mrb[0].mxu0
  %v253 = vadd.f32 0.0, %v252
  %v254 = vpop.f32.mrb[0].mxu0
  %v255 = vpop.f32.mrb[0].mxu0
  %v256 = vadd.f32 0.0, %v255
  %v257 = vpop.f32.mrb[0].mxu0
  %258 = vmatprep.mubr.bf16.mxu0 0
  %259 = vmatmul.mubr.bf16.gmra.mrb[0].mxu0 %v134
  %v260 = vpop.f32.mrb[0].mxu0
  %v261 = vadd.f32 0.0, %v260
  %v262 = vpop.f32.mrb[0].mxu0
  %v263 = vpop.f32.mrb[0].mxu0
  %v264 = vadd.f32 0.0, %v263
  %v265 = vpop.f32.mrb[0].mxu0
  %266 = vmatprep.mubr.bf16.mxu0 0
  %267 = vmatmul.mubr.bf16.gmra.mrb[0].mxu0 %v135
  %v268 = vpop.f32.mrb[0].mxu0
  %v269 = vadd.f32 0.0, %v268
  %v270 = vpop.f32.mrb[0].mxu0
  %v271 = vpop.f32.mrb[0].mxu0
  %v272 = vadd.f32 0.0, %v271
  %v273 = vpop.f32.mrb[0].mxu0
  %274 = vmatprep.mubr.bf16.mxu0 0
  %275 = vmatmul.mubr.bf16.gmra.mrb[0].mxu0 %v136
  %v276 = vpop.f32.mrb[0].mxu0
  %v277 = vadd.f32 0.0, %v276
  %v278 = vpop.f32.mrb[0].mxu0
  %v279 = vpop.f32.mrb[0].mxu0
  %v280 = vadd.f32 0.0, %v279
  %v281 = vpop.f32.mrb[0].mxu0
  %282 = vmatprep.mubr.bf16.mxu0 0
  %283 = vmatmul.mubr.bf16.gmra.mrb[0].mxu0 %v137
  %v284 = vpop.f32.mrb[0].mxu0
  %v285 = vadd.f32 0.0, %v284
  %v286 = vpop.f32.mrb[0].mxu0
  %v287 = vpop.f32.mrb[0].mxu0
  %v288 = vadd.f32 0.0, %v287
  %v289 = vpop.f32.mrb[0].mxu0
  %290 = vdwg.mxu0
  %v291 = vadd.f32 %v50, %v229
  %v292 = vadd.f32 %v51, %v232
  %v293 = vadd.f32 %v52, %v237
  %v294 = vadd.f32 %v53, %v240
  %v295 = vadd.f32 %v54, %v245
  %v296 = vadd.f32 %v55, %v248
  %v297 = vadd.f32 %v56, %v253
  %v298 = vadd.f32 %v57, %v256
  %v299 = vadd.f32 %v58, %v261
  %v300 = vadd.f32 %v59, %v264
  %v301 = vadd.f32 %v60, %v269
  %v302 = vadd.f32 %v61, %v272
  %v303 = vadd.f32 %v62, %v277
  %v304 = vadd.f32 %v63, %v280
  %v305 = vadd.f32 %v64, %v285
  %v306 = vadd.f32 %v65, %v288
  %307 = vst [vmem:[#allocation2] sm:$0xff] %v291
  %308 = vst [vmem:[#allocation2 + $0x8] sm:$0xff] %v292
  %309 = vst [vmem:[#allocation2 + $0x10] sm:$0xff] %v293
  %310 = vst [vmem:[#allocation2 + $0x18] sm:$0xff] %v294
  %311 = vst [vmem:[#allocation2 + $0x20] sm:$0xff] %v295
  %312 = vst [vmem:[#allocation2 + $0x28] sm:$0xff] %v296
  %313 = vst [vmem:[#allocation2 + $0x30] sm:$0xff] %v297
  %314 = vst [vmem:[#allocation2 + $0x38] sm:$0xff] %v298
  %315 = vst [vmem:[#allocation2 + $0x40] sm:$0xff] %v299
  %316 = vst [vmem:[#allocation2 + $0x48] sm:$0xff] %v300
  %317 = vst [vmem:[#allocation2 + $0x50] sm:$0xff] %v301
  %318 = vst [vmem:[#allocation2 + $0x58] sm:$0xff] %v302
  %319 = vst [vmem:[#allocation2 + $0x60] sm:$0xff] %v303
  %320 = vst [vmem:[#allocation2 + $0x68] sm:$0xff] %v304
  %321 = vst [vmem:[#allocation2 + $0x70] sm:$0xff] %v305
  %322 = vst [vmem:[#allocation2 + $0x78] sm:$0xff] %v306
  // Predicated region
  $region38: #{gnn_decoder_forward.1} parent=0 // pred_check
    %p323 = pneg %p30
  $region39: #{gnn_decoder_forward.1} parent=0 // pred_check_branch
    %325 = sbr.rel (%p323) target = $region41
  $region40: #{gnn_decoder_forward.1} parent=0 // pred_region
    %v326 = vld [vmem:[#allocation2] sm:$0xff]
    %v327 = vld [vmem:[#allocation2 + $0x8] sm:$0xff]
    %v328 = vld [vmem:[#allocation2 + $0x10] sm:$0xff]
    %v329 = vld [vmem:[#allocation2 + $0x18] sm:$0xff]
    %v330 = vld [vmem:[#allocation2 + $0x20] sm:$0xff]
    %v331 = vld [vmem:[#allocation2 + $0x28] sm:$0xff]
    %v332 = vld [vmem:[#allocation2 + $0x30] sm:$0xff]
    %v333 = vld [vmem:[#allocation2 + $0x38] sm:$0xff]
    %v334 = vld [vmem:[#allocation2 + $0x40] sm:$0xff]
    %v335 = vld [vmem:[#allocation2 + $0x48] sm:$0xff]
    %v336 = vld [vmem:[#allocation2 + $0x50] sm:$0xff]
    %v337 = vld [vmem:[#allocation2 + $0x58] sm:$0xff]
    %v338 = vld [vmem:[#allocation2 + $0x60] sm:$0xff]
    %v339 = vld [vmem:[#allocation2 + $0x68] sm:$0xff]
    %v340 = vld [vmem:[#allocation2 + $0x70] sm:$0xff]
    %v341 = vld [vmem:[#allocation2 + $0x78] sm:$0xff]
    %v342 = vpack.c.bf16 %v327, %v326
    %v343 = vpack.c.bf16 %v329, %v328
    %v344 = vpack.c.bf16 %v331, %v330
    %v345 = vpack.c.bf16 %v333, %v332
    %v346 = vpack.c.bf16 %v335, %v334
    %v347 = vpack.c.bf16 %v337, %v336
    %v348 = vpack.c.bf16 %v339, %v338
    %v349 = vpack.c.bf16 %v341, %v340
    %v350 = vld [vmem:[%s3] sm:$0xf]
    %v351 = vld [vmem:[%s3 + $0x4] sm:$0xf]
    %v352 = vld [vmem:[%s3 + $0x8] sm:$0xf]
    %v353 = vld [vmem:[%s3 + $0xc] sm:$0xf]
    %v354 = vld [vmem:[%s3 + $0x10] sm:$0xf]
    %v355 = vld [vmem:[%s3 + $0x14] sm:$0xf]
    %v356 = vld [vmem:[%s3 + $0x18] sm:$0xf]
    %v357 = vld [vmem:[%s3 + $0x1c] sm:$0xf]
    %v358 = vld [vmem:[%s3 + $0x20] sm:$0xf]
    %v359 = vld [vmem:[%s3 + $0x24] sm:$0xf]
    %v360 = vld [vmem:[%s3 + $0x28] sm:$0xf]
    %v361 = vld [vmem:[%s3 + $0x2c] sm:$0xf]
    %v362 = vld [vmem:[%s3 + $0x30] sm:$0xf]
    %v363 = vld [vmem:[%s3 + $0x34] sm:$0xf]
    %v364 = vld [vmem:[%s3 + $0x38] sm:$0xf]
    %v365 = vld [vmem:[%s3 + $0x3c] sm:$0xf]
    %v366 = vld [vmem:[%s2] sm:$0xff]
    %v367 = vld [vmem:[%s2 + $0x8] sm:$0xff]
    %v368 = vld [vmem:[%s2 + $0x10] sm:$0xff]
    %v369 = vld [vmem:[%s2 + $0x18] sm:$0xff]
    %v370 = vld [vmem:[%s2 + $0x20] sm:$0xff]
    %v371 = vld [vmem:[%s2 + $0x28] sm:$0xff]
    %v372 = vld [vmem:[%s2 + $0x30] sm:$0xff]
    %v373 = vld [vmem:[%s2 + $0x38] sm:$0xff]
    %v374 = vld [vmem:[%s2 + $0x40] sm:$0xff]
    %v375 = vld [vmem:[%s2 + $0x48] sm:$0xff]
    %v376 = vld [vmem:[%s2 + $0x50] sm:$0xff]
    %v377 = vld [vmem:[%s2 + $0x58] sm:$0xff]
    %v378 = vld [vmem:[%s2 + $0x60] sm:$0xff]
    %v379 = vld [vmem:[%s2 + $0x68] sm:$0xff]
    %v380 = vld [vmem:[%s2 + $0x70] sm:$0xff]
    %v381 = vld [vmem:[%s2 + $0x78] sm:$0xff]
    %v398 = vunpack.c.l.b16 %v350
    %v399 = vunpack.c.l.b16 %v351
    %v400 = vunpack.c.l.b16 %v352
    %v401 = vunpack.c.l.b16 %v353
    %v402 = vunpack.c.l.b16 %v354
    %v403 = vunpack.c.l.b16 %v355
    %v404 = vunpack.c.l.b16 %v356
    %v405 = vunpack.c.l.b16 %v357
    %v406 = vunpack.c.l.b16 %v358
    %v407 = vunpack.c.l.b16 %v359
    %v408 = vunpack.c.l.b16 %v360
    %v409 = vunpack.c.l.b16 %v361
    %v410 = vunpack.c.l.b16 %v362
    %v411 = vunpack.c.l.b16 %v363
    %v412 = vunpack.c.l.b16 %v364
    %v413 = vunpack.c.l.b16 %v365
    %v414 = vpack.c.b16 %v399, %v398
    %v415 = vpack.c.b16 %v401, %v400
    %v416 = vpack.c.b16 %v403, %v402
    %v417 = vpack.c.b16 %v405, %v404
    %v418 = vpack.c.b16 %v407, %v406
    %v419 = vpack.c.b16 %v409, %v408
    %v420 = vpack.c.b16 %v411, %v410
    %v421 = vpack.c.b16 %v413, %v412
    %430 = vmatprep.subr.bf16.mxu0 0
    %431 = vmatpush1.bf16.msra.mxu0 %v414
    %432 = vmatprep.subr.bf16.mxu0 0
    %433 = vmatpush1.bf16.msra.mxu0 %v415
    %434 = vmatprep.subr.bf16.mxu0 0
    %435 = vmatpush1.bf16.msra.mxu0 %v416
    %436 = vmatprep.subr.bf16.mxu0 0
    %437 = vmatpush1.bf16.msra.mxu0 %v417
    %438 = vmatprep.subr.bf16.mxu0 0
    %439 = vmatpush1.bf16.msra.mxu0 %v418
    %440 = vmatprep.subr.bf16.mxu0 0
    %441 = vmatpush1.bf16.msra.mxu0 %v419
    %442 = vmatprep.subr.bf16.mxu0 0
    %443 = vmatpush1.bf16.msra.mxu0 %v420
    %444 = vmatprep.subr.bf16.mxu0 0
    %445 = vmatpush1.bf16.msra.mxu0 %v421
    %446 = vmatprep.subr.bf16.mxu0 0
    %447 = vmatpush1.bf16.msra.mxu0 0
    %448 = vmatprep.subr.bf16.mxu0 0
    %449 = vmatpush1.bf16.msra.mxu0 0
    %450 = vmatprep.subr.bf16.mxu0 0
    %451 = vmatpush1.bf16.msra.mxu0 0
    %452 = vmatprep.subr.bf16.mxu0 0
    %453 = vmatpush1.bf16.msra.mxu0 0
    %454 = vmatprep.subr.bf16.mxu0 0
    %455 = vmatpush1.bf16.msra.mxu0 0
    %456 = vmatprep.subr.bf16.mxu0 0
    %457 = vmatpush1.bf16.msra.mxu0 0
    %458 = vmatprep.subr.bf16.mxu0 0
    %459 = vmatpush1.bf16.msra.mxu0 0
    %460 = vmatprep.subr.bf16.mxu0 0
    %461 = vmatpush1.bf16.msra.mxu0 0
    %462 = vmatprep.mubr.bf16.mxu0 0
    %463 = vmatmul.mubr.bf16.gmra.mrb[0].mxu0 %v342
    %v464 = vpop.f32.mrb[0].mxu0
    %v465 = vadd.f32 %v366, %v464
    %v466 = vpop.f32.mrb[0].mxu0
    %v467 = vpop.f32.mrb[0].mxu0
    %v468 = vadd.f32 %v367, %v467
    %v469 = vpop.f32.mrb[0].mxu0
    %470 = vmatprep.mubr.bf16.mxu0 0
    %471 = vmatmul.mubr.bf16.gmra.mrb[0].mxu0 %v343
    %v472 = vpop.f32.mrb[0].mxu0
    %v473 = vadd.f32 %v368, %v472
    %v474 = vpop.f32.mrb[0].mxu0
    %v475 = vpop.f32.mrb[0].mxu0
    %v476 = vadd.f32 %v369, %v475
    %v477 = vpop.f32.mrb[0].mxu0
    %478 = vmatprep.mubr.bf16.mxu0 0
    %479 = vmatmul.mubr.bf16.gmra.mrb[0].mxu0 %v344
    %v480 = vpop.f32.mrb[0].mxu0
    %v481 = vadd.f32 %v370, %v480
    %v482 = vpop.f32.mrb[0].mxu0
    %v483 = vpop.f32.mrb[0].mxu0
    %v484 = vadd.f32 %v371, %v483
    %v485 = vpop.f32.mrb[0].mxu0
    %486 = vmatprep.mubr.bf16.mxu0 0
    %487 = vmatmul.mubr.bf16.gmra.mrb[0].mxu0 %v345
    %v488 = vpop.f32.mrb[0].mxu0
    %v489 = vadd.f32 %v372, %v488
    %v490 = vpop.f32.mrb[0].mxu0
    %v491 = vpop.f32.mrb[0].mxu0
    %v492 = vadd.f32 %v373, %v491
    %v493 = vpop.f32.mrb[0].mxu0
    %494 = vmatprep.mubr.bf16.mxu0 0
    %495 = vmatmul.mubr.bf16.gmra.mrb[0].mxu0 %v346
    %v496 = vpop.f32.mrb[0].mxu0
    %v497 = vadd.f32 %v374, %v496
    %v498 = vpop.f32.mrb[0].mxu0
    %v499 = vpop.f32.mrb[0].mxu0
    %v500 = vadd.f32 %v375, %v499
    %v501 = vpop.f32.mrb[0].mxu0
    %502 = vmatprep.mubr.bf16.mxu0 0
    %503 = vmatmul.mubr.bf16.gmra.mrb[0].mxu0 %v347
    %v504 = vpop.f32.mrb[0].mxu0
    %v505 = vadd.f32 %v376, %v504
    %v506 = vpop.f32.mrb[0].mxu0
    %v507 = vpop.f32.mrb[0].mxu0
    %v508 = vadd.f32 %v377, %v507
    %v509 = vpop.f32.mrb[0].mxu0
    %510 = vmatprep.mubr.bf16.mxu0 0
    %511 = vmatmul.mubr.bf16.gmra.mrb[0].mxu0 %v348
    %v512 = vpop.f32.mrb[0].mxu0
    %v513 = vadd.f32 %v378, %v512
    %v514 = vpop.f32.mrb[0].mxu0
    %v515 = vpop.f32.mrb[0].mxu0
    %v516 = vadd.f32 %v379, %v515
    %v517 = vpop.f32.mrb[0].mxu0
    %518 = vmatprep.mubr.bf16.mxu0 0
    %519 = vmatmul.mubr.bf16.gmra.mrb[0].mxu0 %v349
    %v520 = vpop.f32.mrb[0].mxu0
    %v521 = vadd.f32 %v380, %v520
    %v522 = vpop.f32.mrb[0].mxu0
    %v523 = vpop.f32.mrb[0].mxu0
    %v524 = vadd.f32 %v381, %v523
    %v525 = vpop.f32.mrb[0].mxu0
    %526 = vdwg.mxu0
    %v527 = vpack.c.bf16 %v468, %v465
    %v528 = vpack.c.bf16 %v476, %v473
    %v529 = vpack.c.bf16 %v484, %v481
    %v530 = vpack.c.bf16 %v492, %v489
    %v531 = vpack.c.bf16 %v500, %v497
    %v532 = vpack.c.bf16 %v508, %v505
    %v533 = vpack.c.bf16 %v516, %v513
    %v534 = vpack.c.bf16 %v524, %v521
    %v535 = vld [vmem:[%s4] sm:$0xf]
    %v536 = vld [vmem:[%s4 + $0x4] sm:$0xf]
    %v537 = vld [vmem:[%s4 + $0x8] sm:$0xf]
    %v538 = vld [vmem:[%s4 + $0xc] sm:$0xf]
    %v539 = vld [vmem:[%s4 + $0x10] sm:$0xf]
    %v540 = vld [vmem:[%s4 + $0x14] sm:$0xf]
    %v541 = vld [vmem:[%s4 + $0x18] sm:$0xf]
    %v542 = vld [vmem:[%s4 + $0x1c] sm:$0xf]
    %v543 = vld [vmem:[%s4 + $0x20] sm:$0xf]
    %v544 = vld [vmem:[%s4 + $0x24] sm:$0xf]
    %v545 = vld [vmem:[%s4 + $0x28] sm:$0xf]
    %v546 = vld [vmem:[%s4 + $0x2c] sm:$0xf]
    %v547 = vld [vmem:[%s4 + $0x30] sm:$0xf]
    %v548 = vld [vmem:[%s4 + $0x34] sm:$0xf]
    %v549 = vld [vmem:[%s4 + $0x38] sm:$0xf]
    %v550 = vld [vmem:[%s4 + $0x3c] sm:$0xf]
    %v551 = vld [vmem:[%s5] sm:$0x1]
    %v553 = vlaneseq
    %v554 = vshrl.u32 %v553, 7
    %v555 = vsub.s32 0, %v554
    %v556 = vrot.slane %v551, %v555
    %v574 = vunpack.c.l.b16 %v535
    %v575 = vunpack.c.l.b16 %v536
    %v576 = vunpack.c.l.b16 %v537
    %v577 = vunpack.c.l.b16 %v538
    %v578 = vunpack.c.l.b16 %v539
    %v579 = vunpack.c.l.b16 %v540
    %v580 = vunpack.c.l.b16 %v541
    %v581 = vunpack.c.l.b16 %v542
    %v582 = vunpack.c.l.b16 %v543
    %v583 = vunpack.c.l.b16 %v544
    %v584 = vunpack.c.l.b16 %v545
    %v585 = vunpack.c.l.b16 %v546
    %v586 = vunpack.c.l.b16 %v547
    %v587 = vunpack.c.l.b16 %v548
    %v588 = vunpack.c.l.b16 %v549
    %v589 = vunpack.c.l.b16 %v550
    %v590 = vpack.c.b16 %v575, %v574
    %v591 = vpack.c.b16 %v577, %v576
    %v592 = vpack.c.b16 %v579, %v578
    %v593 = vpack.c.b16 %v581, %v580
    %v594 = vpack.c.b16 %v583, %v582
    %v595 = vpack.c.b16 %v585, %v584
    %v596 = vpack.c.b16 %v587, %v586
    %v597 = vpack.c.b16 %v589, %v588
    %606 = vmatprep.subr.bf16.mxu0 0
    %607 = vmatpush1.bf16.msra.mxu0 %v590
    %608 = vmatprep.subr.bf16.mxu0 0
    %609 = vmatpush1.bf16.msra.mxu0 %v591
    %610 = vmatprep.subr.bf16.mxu0 0
    %611 = vmatpush1.bf16.msra.mxu0 %v592
    %612 = vmatprep.subr.bf16.mxu0 0
    %613 = vmatpush1.bf16.msra.mxu0 %v593
    %614 = vmatprep.subr.bf16.mxu0 0
    %615 = vmatpush1.bf16.msra.mxu0 %v594
    %616 = vmatprep.subr.bf16.mxu0 0
    %617 = vmatpush1.bf16.msra.mxu0 %v595
    %618 = vmatprep.subr.bf16.mxu0 0
    %619 = vmatpush1.bf16.msra.mxu0 %v596
    %620 = vmatprep.subr.bf16.mxu0 0
    %621 = vmatpush1.bf16.msra.mxu0 %v597
    %622 = vmatprep.subr.bf16.mxu0 0
    %623 = vmatpush1.bf16.msra.mxu0 0
    %624 = vmatprep.subr.bf16.mxu0 0
    %625 = vmatpush1.bf16.msra.mxu0 0
    %626 = vmatprep.subr.bf16.mxu0 0
    %627 = vmatpush1.bf16.msra.mxu0 0
    %628 = vmatprep.subr.bf16.mxu0 0
    %629 = vmatpush1.bf16.msra.mxu0 0
    %630 = vmatprep.subr.bf16.mxu0 0
    %631 = vmatpush1.bf16.msra.mxu0 0
    %632 = vmatprep.subr.bf16.mxu0 0
    %633 = vmatpush1.bf16.msra.mxu0 0
    %634 = vmatprep.subr.bf16.mxu0 0
    %635 = vmatpush1.bf16.msra.mxu0 0
    %636 = vmatprep.subr.bf16.mxu0 0
    %637 = vmatpush1.bf16.msra.mxu0 0
    %638 = vmatprep.mubr.bf16.mxu0 0
    %639 = vmatmul.mubr.bf16.gmra.mrb[0].mxu0 %v527
    %v640 = vpop.f32.mrb[0].mxu0
    %v641 = vadd.f32 %v556, %v640
    %v642 = vpop.f32.mrb[0].mxu0
    %v643 = vpop.f32.mrb[0].mxu0
    %v644 = vadd.f32 %v556, %v643
    %v645 = vpop.f32.mrb[0].mxu0
    %646 = vmatprep.mubr.bf16.mxu0 0
    %647 = vmatmul.mubr.bf16.gmra.mrb[0].mxu0 %v528
    %v648 = vpop.f32.mrb[0].mxu0
    %v649 = vadd.f32 %v556, %v648
    %v650 = vpop.f32.mrb[0].mxu0
    %v651 = vpop.f32.mrb[0].mxu0
    %v652 = vadd.f32 %v556, %v651
    %v653 = vpop.f32.mrb[0].mxu0
    %654 = vmatprep.mubr.bf16.mxu0 0
    %655 = vmatmul.mubr.bf16.gmra.mrb[0].mxu0 %v529
    %v656 = vpop.f32.mrb[0].mxu0
    %v657 = vadd.f32 %v556, %v656
    %v658 = vpop.f32.mrb[0].mxu0
    %v659 = vpop.f32.mrb[0].mxu0
    %v660 = vadd.f32 %v556, %v659
    %v661 = vpop.f32.mrb[0].mxu0
    %662 = vmatprep.mubr.bf16.mxu0 0
    %663 = vmatmul.mubr.bf16.gmra.mrb[0].mxu0 %v530
    %v664 = vpop.f32.mrb[0].mxu0
    %v665 = vadd.f32 %v556, %v664
    %v666 = vpop.f32.mrb[0].mxu0
    %v667 = vpop.f32.mrb[0].mxu0
    %v668 = vadd.f32 %v556, %v667
    %v669 = vpop.f32.mrb[0].mxu0
    %670 = vmatprep.mubr.bf16.mxu0 0
    %671 = vmatmul.mubr.bf16.gmra.mrb[0].mxu0 %v531
    %v672 = vpop.f32.mrb[0].mxu0
    %v673 = vadd.f32 %v556, %v672
    %v674 = vpop.f32.mrb[0].mxu0
    %v675 = vpop.f32.mrb[0].mxu0
    %v676 = vadd.f32 %v556, %v675
    %v677 = vpop.f32.mrb[0].mxu0
    %678 = vmatprep.mubr.bf16.mxu0 0
    %679 = vmatmul.mubr.bf16.gmra.mrb[0].mxu0 %v532
    %v680 = vpop.f32.mrb[0].mxu0
    %v681 = vadd.f32 %v556, %v680
    %v682 = vpop.f32.mrb[0].mxu0
    %v683 = vpop.f32.mrb[0].mxu0
    %v684 = vadd.f32 %v556, %v683
    %v685 = vpop.f32.mrb[0].mxu0
    %686 = vmatprep.mubr.bf16.mxu0 0
    %687 = vmatmul.mubr.bf16.gmra.mrb[0].mxu0 %v533
    %v688 = vpop.f32.mrb[0].mxu0
    %v689 = vadd.f32 %v556, %v688
    %v690 = vpop.f32.mrb[0].mxu0
    %v691 = vpop.f32.mrb[0].mxu0
    %v692 = vadd.f32 %v556, %v691
    %v693 = vpop.f32.mrb[0].mxu0
    %694 = vmatprep.mubr.bf16.mxu0 0
    %695 = vmatmul.mubr.bf16.gmra.mrb[0].mxu0 %v534
    %v696 = vpop.f32.mrb[0].mxu0
    %v697 = vadd.f32 %v556, %v696
    %v698 = vpop.f32.mrb[0].mxu0
    %v699 = vpop.f32.mrb[0].mxu0
    %v700 = vadd.f32 %v556, %v699
    %v701 = vpop.f32.mrb[0].mxu0
    %702 = vdwg.mxu0
    %v703 = vmax.f32 %v641, 0.0
    %v704 = vmax.f32 %v644, 0.0
    %v705 = vmax.f32 %v649, 0.0
    %v706 = vmax.f32 %v652, 0.0
    %v707 = vmax.f32 %v657, 0.0
    %v708 = vmax.f32 %v660, 0.0
    %v709 = vmax.f32 %v665, 0.0
    %v710 = vmax.f32 %v668, 0.0
    %v711 = vmax.f32 %v673, 0.0
    %v712 = vmax.f32 %v676, 0.0
    %v713 = vmax.f32 %v681, 0.0
    %v714 = vmax.f32 %v684, 0.0
    %v715 = vmax.f32 %v689, 0.0
    %v716 = vmax.f32 %v692, 0.0
    %v717 = vmax.f32 %v697, 0.0
    %v718 = vmax.f32 %v700, 0.0
    %v719 = vpack.c.bf16 %v704, %v703
    %v720 = vpack.c.bf16 %v706, %v705
    %v721 = vpack.c.bf16 %v708, %v707
    %v722 = vpack.c.bf16 %v710, %v709
    %v723 = vpack.c.bf16 %v712, %v711
    %v724 = vpack.c.bf16 %v714, %v713
    %v725 = vpack.c.bf16 %v716, %v715
    %v726 = vpack.c.bf16 %v718, %v717
    %v727 = vld [vmem:[%s6] sm:$0xf]
    %v728 = vld [vmem:[%s6 + $0x4] sm:$0xf]
    %v729 = vld [vmem:[%s6 + $0x8] sm:$0xf]
    %v730 = vld [vmem:[%s6 + $0xc] sm:$0xf]
    %v731 = vld [vmem:[%s6 + $0x10] sm:$0xf]
    %v732 = vld [vmem:[%s6 + $0x14] sm:$0xf]
    %v733 = vld [vmem:[%s6 + $0x18] sm:$0xf]
    %v734 = vld [vmem:[%s6 + $0x1c] sm:$0xf]
    %v735 = vld [vmem:[%s6 + $0x20] sm:$0xf]
    %v736 = vld [vmem:[%s6 + $0x24] sm:$0xf]
    %v737 = vld [vmem:[%s6 + $0x28] sm:$0xf]
    %v738 = vld [vmem:[%s6 + $0x2c] sm:$0xf]
    %v739 = vld [vmem:[%s6 + $0x30] sm:$0xf]
    %v740 = vld [vmem:[%s6 + $0x34] sm:$0xf]
    %v741 = vld [vmem:[%s6 + $0x38] sm:$0xf]
    %v742 = vld [vmem:[%s6 + $0x3c] sm:$0xf]
    %v743 = vld [vmem:[%s7] sm:$0x1]
    %v745 = vlaneseq
    %v746 = vshrl.u32 %v745, 7
    %v747 = vsub.s32 0, %v746
    %v748 = vrot.slane %v743, %v747
    %v766 = vunpack.c.l.b16 %v727
    %v767 = vunpack.c.l.b16 %v728
    %v768 = vunpack.c.l.b16 %v729
    %v769 = vunpack.c.l.b16 %v730
    %v770 = vunpack.c.l.b16 %v731
    %v771 = vunpack.c.l.b16 %v732
    %v772 = vunpack.c.l.b16 %v733
    %v773 = vunpack.c.l.b16 %v734
    %v774 = vunpack.c.l.b16 %v735
    %v775 = vunpack.c.l.b16 %v736
    %v776 = vunpack.c.l.b16 %v737
    %v777 = vunpack.c.l.b16 %v738
    %v778 = vunpack.c.l.b16 %v739
    %v779 = vunpack.c.l.b16 %v740
    %v780 = vunpack.c.l.b16 %v741
    %v781 = vunpack.c.l.b16 %v742
    %v782 = vpack.c.b16 %v767, %v766
    %v783 = vpack.c.b16 %v769, %v768
    %v784 = vpack.c.b16 %v771, %v770
    %v785 = vpack.c.b16 %v773, %v772
    %v786 = vpack.c.b16 %v775, %v774
    %v787 = vpack.c.b16 %v777, %v776
    %v788 = vpack.c.b16 %v779, %v778
    %v789 = vpack.c.b16 %v781, %v780
    %798 = vmatprep.subr.bf16.mxu0 0
    %799 = vmatpush1.bf16.msra.mxu0 %v782
    %800 = vmatprep.subr.bf16.mxu0 0
    %801 = vmatpush1.bf16.msra.mxu0 %v783
    %802 = vmatprep.subr.bf16.mxu0 0
    %803 = vmatpush1.bf16.msra.mxu0 %v784
    %804 = vmatprep.subr.bf16.mxu0 0
    %805 = vmatpush1.bf16.msra.mxu0 %v785
    %806 = vmatprep.subr.bf16.mxu0 0
    %807 = vmatpush1.bf16.msra.mxu0 %v786
    %808 = vmatprep.subr.bf16.mxu0 0
    %809 = vmatpush1.bf16.msra.mxu0 %v787
    %810 = vmatprep.subr.bf16.mxu0 0
    %811 = vmatpush1.bf16.msra.mxu0 %v788
    %812 = vmatprep.subr.bf16.mxu0 0
    %813 = vmatpush1.bf16.msra.mxu0 %v789
    %814 = vmatprep.subr.bf16.mxu0 0
    %815 = vmatpush1.bf16.msra.mxu0 0
    %816 = vmatprep.subr.bf16.mxu0 0
    %817 = vmatpush1.bf16.msra.mxu0 0
    %818 = vmatprep.subr.bf16.mxu0 0
    %819 = vmatpush1.bf16.msra.mxu0 0
    %820 = vmatprep.subr.bf16.mxu0 0
    %821 = vmatpush1.bf16.msra.mxu0 0
    %822 = vmatprep.subr.bf16.mxu0 0
    %823 = vmatpush1.bf16.msra.mxu0 0
    %824 = vmatprep.subr.bf16.mxu0 0
    %825 = vmatpush1.bf16.msra.mxu0 0
    %826 = vmatprep.subr.bf16.mxu0 0
    %827 = vmatpush1.bf16.msra.mxu0 0
    %828 = vmatprep.subr.bf16.mxu0 0
    %829 = vmatpush1.bf16.msra.mxu0 0
    %830 = vmatprep.mubr.bf16.mxu0 0
    %831 = vmatmul.mubr.bf16.gmra.mrb[0].mxu0 %v719
    %v832 = vpop.f32.mrb[0].mxu0
    %v833 = vadd.f32 %v748, %v832
    %v834 = vpop.f32.mrb[0].mxu0
    %v835 = vpop.f32.mrb[0].mxu0
    %v836 = vadd.f32 %v748, %v835
    %v837 = vpop.f32.mrb[0].mxu0
    %838 = vmatprep.mubr.bf16.mxu0 0
    %839 = vmatmul.mubr.bf16.gmra.mrb[0].mxu0 %v720
    %v840 = vpop.f32.mrb[0].mxu0
    %v841 = vadd.f32 %v748, %v840
    %v842 = vpop.f32.mrb[0].mxu0
    %v843 = vpop.f32.mrb[0].mxu0
    %v844 = vadd.f32 %v748, %v843
    %v845 = vpop.f32.mrb[0].mxu0
    %846 = vmatprep.mubr.bf16.mxu0 0
    %847 = vmatmul.mubr.bf16.gmra.mrb[0].mxu0 %v721
    %v848 = vpop.f32.mrb[0].mxu0
    %v849 = vadd.f32 %v748, %v848
    %v850 = vpop.f32.mrb[0].mxu0
    %v851 = vpop.f32.mrb[0].mxu0
    %v852 = vadd.f32 %v748, %v851
    %v853 = vpop.f32.mrb[0].mxu0
    %854 = vmatprep.mubr.bf16.mxu0 0
    %855 = vmatmul.mubr.bf16.gmra.mrb[0].mxu0 %v722
    %v856 = vpop.f32.mrb[0].mxu0
    %v857 = vadd.f32 %v748, %v856
    %v858 = vpop.f32.mrb[0].mxu0
    %v859 = vpop.f32.mrb[0].mxu0
    %v860 = vadd.f32 %v748, %v859
    %v861 = vpop.f32.mrb[0].mxu0
    %862 = vmatprep.mubr.bf16.mxu0 0
    %863 = vmatmul.mubr.bf16.gmra.mrb[0].mxu0 %v723
    %v864 = vpop.f32.mrb[0].mxu0
    %v865 = vadd.f32 %v748, %v864
    %v866 = vpop.f32.mrb[0].mxu0
    %v867 = vpop.f32.mrb[0].mxu0
    %v868 = vadd.f32 %v748, %v867
    %v869 = vpop.f32.mrb[0].mxu0
    %870 = vmatprep.mubr.bf16.mxu0 0
    %871 = vmatmul.mubr.bf16.gmra.mrb[0].mxu0 %v724
    %v872 = vpop.f32.mrb[0].mxu0
    %v873 = vadd.f32 %v748, %v872
    %v874 = vpop.f32.mrb[0].mxu0
    %v875 = vpop.f32.mrb[0].mxu0
    %v876 = vadd.f32 %v748, %v875
    %v877 = vpop.f32.mrb[0].mxu0
    %878 = vmatprep.mubr.bf16.mxu0 0
    %879 = vmatmul.mubr.bf16.gmra.mrb[0].mxu0 %v725
    %v880 = vpop.f32.mrb[0].mxu0
    %v881 = vadd.f32 %v748, %v880
    %v882 = vpop.f32.mrb[0].mxu0
    %v883 = vpop.f32.mrb[0].mxu0
    %v884 = vadd.f32 %v748, %v883
    %v885 = vpop.f32.mrb[0].mxu0
    %886 = vmatprep.mubr.bf16.mxu0 0
    %887 = vmatmul.mubr.bf16.gmra.mrb[0].mxu0 %v726
    %v888 = vpop.f32.mrb[0].mxu0
    %v889 = vadd.f32 %v748, %v888
    %v890 = vpop.f32.mrb[0].mxu0
    %v891 = vpop.f32.mrb[0].mxu0
    %v892 = vadd.f32 %v748, %v891
    %v893 = vpop.f32.mrb[0].mxu0
    %894 = vdwg.mxu0
    %895 = vst [vmem:[%s8] sm:$0xff] %v833
    %896 = vst [vmem:[%s8 + $0x8] sm:$0xff] %v836
    %897 = vst [vmem:[%s8 + $0x10] sm:$0xff] %v841
    %898 = vst [vmem:[%s8 + $0x18] sm:$0xff] %v844
    %899 = vst [vmem:[%s8 + $0x20] sm:$0xff] %v849
    %900 = vst [vmem:[%s8 + $0x28] sm:$0xff] %v852
    %901 = vst [vmem:[%s8 + $0x30] sm:$0xff] %v857
    %902 = vst [vmem:[%s8 + $0x38] sm:$0xff] %v860
    %903 = vst [vmem:[%s8 + $0x40] sm:$0xff] %v865
    %904 = vst [vmem:[%s8 + $0x48] sm:$0xff] %v868
    %905 = vst [vmem:[%s8 + $0x50] sm:$0xff] %v873
    %906 = vst [vmem:[%s8 + $0x58] sm:$0xff] %v876
    %907 = vst [vmem:[%s8 + $0x60] sm:$0xff] %v881
    %908 = vst [vmem:[%s8 + $0x68] sm:$0xff] %v884
    %909 = vst [vmem:[%s8 + $0x70] sm:$0xff] %v889
    %910 = vst [vmem:[%s8 + $0x78] sm:$0xff] %v892
  $region41: #{gnn_decoder_forward.1} parent=0 // pred_fallthru
    _
  // Predicated region
  $region42: #{gnn_decoder_forward.1} parent=0 // pred_check
    _
  $region43: #{gnn_decoder_forward.1} parent=0 // pred_check_branch
    %912 = sbr.rel (0) target = $region45
  $region44: #{gnn_decoder_forward.1} parent=0 // pred_region
    _
  $region45: #{gnn_decoder_forward.1} parent=0 // pred_fallthru
    _
  // Predicated region
  $region46: #{gnn_decoder_forward.1} parent=0 // pred_check
    _
  $region47: #{gnn_decoder_forward.1} parent=0 // pred_check_branch
    %914 = sbr.rel (0) target = $region49
  $region48: #{gnn_decoder_forward.1} parent=0 // pred_region
    _
  $region49: #{gnn_decoder_forward.1} parent=0 // pred_fallthru
    _

</llo_original>
